<compile_context>
chip_gen: v7x
topology: tpu7x:2x2x1
jax: 0.10.0
libtpu: 0.0.40
codegen_flags: <defaults>
</compile_context>

<pallas_src>
import functools

import jax
import jax.numpy as jnp
from jax.experimental import pallas as pl
from jax.experimental.pallas import tpu as pltpu


def _cdiv(a, b):
    return -(-a // b)


def _round_up(a, b):
    return _cdiv(a, b) * b


def _arch_params():
    """Per-generation (row tile, bytes per streamed input buffer, vmem limit, #TC)."""
    try:
        kind = jax.devices()[0].device_kind.lower()
    except Exception:
        kind = ""
    if "v7" in kind:
        # v7x: 64 MiB VMEM / TC but ~3.2 TB/s HBM -> 8 MiB tiles, modest limit, 2 TCs.
        return dict(tr=256, buf_bytes=8 << 20, vmem=48 << 20, n_tc=2)
    if "v6" in kind:
        return dict(tr=256, buf_bytes=8 << 20, vmem=96 << 20, n_tc=1)
    if "v5" in kind:
        return dict(tr=256, buf_bytes=8 << 20, vmem=64 << 20, n_tc=1)
    return dict(tr=128, buf_bytes=4 << 20, vmem=48 << 20, n_tc=1)


# ---------------------------------------------------------------------------
# Streaming kernel: label smoothing (and the fallback path for xe_eps == 0).
# Grid = (row tiles [parallel], vocab tiles [arbitrary, reduction]).
# ---------------------------------------------------------------------------
def _lm_smooth_kernel(inp_ref, tgt_ref, msk_ref, out_ref, acc_ref, *, xe_eps, vocab):
    k = pl.program_id(1)
    nk = pl.num_programs(1)

    @pl.when(k == 0)
    def _init():
        acc_ref[...] = jnp.zeros_like(acc_ref)

    inp = inp_ref[...].astype(jnp.float32)        # (tr, tv) log-probs, f32 accumulation
    tgt = tgt_ref[...]                            # (tr, 1) int32
    tr, tv = inp.shape
    col = jax.lax.broadcasted_iota(jnp.int32, (tr, tv), 1)
    is_label = col == (tgt - k * tv)              # target column local to this tile

    if xe_eps == 0.0:
        # No smoothing: weight 1 at the label column, 0 elsewhere. Select (not mult)
        # so ragged-vocab padding garbage is dropped, never multiplied.
        weighted = jnp.where(is_label, inp, 0.0)
    else:
        # Fused single weighted reduce: w = (1-eps) at the label, eps/(V-1) elsewhere.
        w = jnp.where(is_label, 1.0 - xe_eps, xe_eps / (vocab - 1.0))
        weighted = w * inp
        if vocab % tv != 0:
            # Ragged last vocab tile: drop out-of-range columns with a select AFTER
            # the multiply so 0 * NaN garbage cannot leak into the sum.
            weighted = jnp.where(col + k * tv < vocab, weighted, 0.0)

    # One lane (XLU) reduce per tile; per-row partials stay in VMEM scratch across k.
    acc_ref[...] += jnp.sum(weighted, axis=1, keepdims=True)

    @pl.when(k == nk - 1)
    def _finalize():
        msk = msk_ref[...]                        # (tr, 1) float32
        # Mask as a select so padded / garbage rows contribute exactly 0.
        per_row = jnp.where(msk != 0.0, -acc_ref[...] * msk, 0.0)
        out_ref[...] = jnp.full(out_ref.shape, jnp.sum(per_row), jnp.float32)


def _smooth_sum(inp2, tgt2, msk2, xe_eps, tile_rows, tile_vocab):
    BT, V = inp2.shape
    p = _arch_params()
    itemsize = jnp.dtype(inp2.dtype).itemsize
    sub = 8 * max(1, 4 // itemsize)               # sublane granularity (8 f32, 16 bf16)

    tr_full = _round_up(BT, sub)
    tr = tile_rows if tile_rows is not None else min(p["tr"], tr_full)
    tr = max(sub, _round_up(tr, sub))
    if tile_rows is None and p["n_tc"] > 1 and _cdiv(BT, tr) < 2 and BT > sub:
        # v7x: make sure the "parallel" row axis has >= 2 tiles so both TCs get work.
        tr = _round_up(_cdiv(BT, p["n_tc"]), sub)

    if tile_vocab is not None:
        tv = _round_up(tile_vocab, 128)
    else:
        # dtype-aware byte budget: bf16 gets twice the lanes for the same VMEM bytes.
        tv = max(512, (p["buf_bytes"] // (tr * itemsize)) // 128 * 128)
    tv = max(128, min(tv, _round_up(V, 128)))

    n_rt = _cdiv(BT, tr)
    n_vt = _cdiv(V, tv)

    # Pad only the tiny target/mask arrays so ragged row-tile rows carry mask == 0;
    # the big log-prob tensor is never padded or copied.
    bt_pad = n_rt * tr
    if bt_pad != BT:
        tgt2 = jnp.pad(tgt2, ((0, bt_pad - BT), (0, 0)))
        msk2 = jnp.pad(msk2, ((0, bt_pad - BT), (0, 0)))

    kernel = functools.partial(_lm_smooth_kernel, xe_eps=float(xe_eps), vocab=V)

    partials = pl.pallas_call(
        kernel,
        out_shape=jax.ShapeDtypeStruct((n_rt, 8, 128), jnp.float32),
        grid_spec=pltpu.PrefetchScalarGridSpec(
            num_scalar_prefetch=0,
            grid=(n_rt, n_vt),
            in_specs=[
                pl.BlockSpec((tr, tv), lambda i, k: (i, k)),   # streamed log-probs
                pl.BlockSpec((tr, 1), lambda i, k: (i, 0)),    # target: same block all k
                pl.BlockSpec((tr, 1), lambda i, k: (i, 0)),    # mask:   same block all k
            ],
            out_specs=pl.BlockSpec((1, 8, 128), lambda i, k: (i, 0, 0)),
            scratch_shapes=[pltpu.VMEM((tr, 1), jnp.float32)],  # per-row accumulator
        ),
        compiler_params=pltpu.CompilerParams(
            dimension_semantics=("parallel", "arbitrary"),
            vmem_limit_bytes=p["vmem"],
        ),
    )(inp2, tgt2, msk2)
    # TODO(synk): optional scalar-prefetched skip of fully-masked row tiles (saves HBM
    # traffic proportional to padding fraction).
    return jnp.sum(partials[:, 0, 0])


# ---------------------------------------------------------------------------
# Gather-only kernel for xe_eps == 0: log-probs stay in HBM, per-row DMA of the
# 128-lane slice that contains tgt[b, t].
# ---------------------------------------------------------------------------
_GATHER_CHUNK = 8            # rows per grid step == outstanding row DMAs per step
_GATHER_MAX_ROWS = 64 * 1024  # scalar-prefetch (SMEM) budget for the int32 targets


def _lm_gather_kernel(tgt_smem, tgt_ref, msk_ref, inp_ref, out_ref, buf, sems,
                      *, bt, vocab, chunk):
    i = pl.program_id(0)

    # Issue all row DMAs for this chunk, then wait (they overlap in flight).
    copies = []
    for r in range(chunk):                               # static unroll
        row = jnp.minimum(i * chunk + r, bt - 1)         # clamp ragged tail rows
        t = tgt_smem[row]
        c0 = jnp.minimum((t // 128) * 128, vocab - 128)  # 128-lane window holding t
        cp = pltpu.make_async_copy(
            inp_ref.at[pl.ds(row, 1), pl.ds(c0, 128)],
            buf.at[pl.ds(r, 1)],
            sems.at[r],
        )
        cp.start()
        copies.append(cp)
    for cp in copies:
        cp.wait()
    # TODO(synk): double-buffer the row DMAs across grid steps / raise chunk for more
    # DMA concurrency once semaphore budget allows.

    vals = buf[...].astype(jnp.float32)                  # (chunk, 128)
    t_vec = tgt_ref[...]                                 # (chunk, 1) int32
    c0_vec = jnp.minimum((t_vec // 128) * 128, vocab - 128)
    local = t_vec - c0_vec                               # column inside the window
    col = jax.lax.broadcasted_iota(jnp.int32, (chunk, 128), 1)
    label = jnp.sum(jnp.where(col == local, vals, 0.0), axis=1, keepdims=True)
    msk = msk_ref[...]
    contrib = jnp.where(msk != 0.0, -label * msk, 0.0)   # (chunk, 1)
    out_ref[0] = jnp.broadcast_to(contrib, (chunk, 128))


def _gather_sum(inp2, tgt2, msk2):
    BT, V = inp2.shape
    chunk = _GATHER_CHUNK
    bt_pad = _round_up(BT, chunk)
    if bt_pad != BT:
        tgt2 = jnp.pad(tgt2, ((0, bt_pad - BT), (0, 0)))
        msk2 = jnp.pad(msk2, ((0, bt_pad - BT), (0, 0)))
    tgt_flat = tgt2[:, 0]                                 # scalar-prefetched targets
    n_steps = bt_pad // chunk

    kernel = functools.partial(_lm_gather_kernel, bt=BT, vocab=V, chunk=chunk)

    partials = pl.pallas_call(
        kernel,
        out_shape=jax.ShapeDtypeStruct((n_steps, chunk, 128), jnp.float32),
        grid_spec=pltpu.PrefetchScalarGridSpec(
            num_scalar_prefetch=1,                        # targets -> SMEM for addressing
            grid=(n_steps,),
            in_specs=[
                pl.BlockSpec((chunk, 1), lambda i, t: (i, 0)),  # targets (vector view)
                pl.BlockSpec((chunk, 1), lambda i, t: (i, 0)),  # mask
                pl.BlockSpec(memory_space=pl.ANY),              # log-probs stay in HBM
            ],
            out_specs=pl.BlockSpec((1, chunk, 128), lambda i, t: (i, 0, 0)),
            scratch_shapes=[
                pltpu.VMEM((chunk, 128), inp2.dtype),
                pltpu.SemaphoreType.DMA((chunk,)),
            ],
        ),
        compiler_params=pltpu.CompilerParams(
            dimension_semantics=("parallel",),
        ),
    )(tgt_flat, tgt2, msk2, inp2)
    return jnp.sum(partials[:, :, 0])


# ---------------------------------------------------------------------------
# Public wrapper (matches LanguageModelCriterion.forward semantics).
# ---------------------------------------------------------------------------
def language_model_criterion(inp, target, mask, xe_eps=0.0,
                             tile_rows=None, tile_vocab=None):
    """inp: (B, T, V) log-probs (f32 or bf16); target: (B, >=T) ints; mask: (B, >=T)."""
    B, T, V = inp.shape
    target = target[:, :T].astype(jnp.int32)
    mask = mask[:, :T].astype(jnp.float32)

    BT = B * T
    inp2 = inp.reshape(BT, V)
    tgt2 = target.reshape(BT, 1)
    msk2 = mask.reshape(BT, 1)

    xe_eps = float(xe_eps)
    # Gather-only path: needs only BT of the BT*V elements.
    # TODO(synk): extend the gather kernel to non-128-multiple vocab sizes (unaligned
    # DMA windows) and sub-32-bit dtypes; those cases currently fall back to streaming.
    use_gather = (
        xe_eps == 0.0
        and V >= 128 and V % 128 == 0
        and jnp.dtype(inp.dtype).itemsize == 4
        and _round_up(BT, _GATHER_CHUNK) <= _GATHER_MAX_ROWS
        and tile_rows is None and tile_vocab is None
    )
    if use_gather:
        num = _gather_sum(inp2, tgt2, msk2)
    else:
        num = _smooth_sum(inp2, tgt2, msk2, xe_eps, tile_rows, tile_vocab)

    # TODO(synk): like the PyTorch module, no guard against sum(mask) == 0.
    den = jnp.sum(mask)
    return num / den


def _reference(inp, target, mask, xe_eps=0.0):
    B, T, V = inp.shape
    target = target[:, :T]
    mask = mask[:, :T].astype(jnp.float32)
    label_lp = jnp.take_along_axis(inp, target[:, :, None], axis=2)[:, :, 0]
    other_lp = jnp.sum(inp, axis=2) - label_lp
    out = -((1.0 - xe_eps) * label_lp + xe_eps / (V - 1) * other_lp) * mask
    return jnp.sum(out) / jnp.sum(mask)


if __name__ == "__main__":
    key = jax.random.PRNGKey(0)
    ks = jax.random.split(key, 9)

    # --- test 1: label smoothing on, evenly tiled shapes (streaming kernel) ---
    B, T, V, T_full = 2, 8, 256, 10
    inp = jax.nn.log_softmax(jax.random.normal(ks[0], (B, T, V), jnp.float32), axis=-1)
    target = jax.random.randint(ks[1], (B, T_full), 0, V, dtype=jnp.int32)
    mask = (jax.random.uniform(ks[2], (B, T_full)) > 0.3).astype(jnp.float32)
    mask = mask.at[0, 0].set(1.0)  # guarantee a nonzero mask sum

    out = jax.block_until_ready(language_model_criterion(inp, target, mask, xe_eps=0.1))
    ref = _reference(inp, target, mask, xe_eps=0.1)
    assert jnp.allclose(out, ref, rtol=1e-5, atol=1e-5), (out, ref)

    # --- test 2: no smoothing -> gather-only Pallas kernel (f32, V % 128 == 0) ---
    out0 = jax.block_until_ready(language_model_criterion(inp, target, mask, xe_eps=0.0))
    ref0 = _reference(inp, target, mask, xe_eps=0.0)
    assert jnp.allclose(out0, ref0, rtol=1e-5, atol=1e-5), (out0, ref0)

    # --- test 3: ragged row/vocab tiles with smoothing (streaming kernel) ---
    Br, Tr, Vr, Tr_full = 2, 5, 200, 7
    inp_r = jax.nn.log_softmax(jax.random.normal(ks[3], (Br, Tr, Vr), jnp.float32), axis=-1)
    tgt_r = jax.random.randint(ks[4], (Br, Tr_full), 0, Vr, dtype=jnp.int32)
    msk_r = (jax.random.uniform(ks[5], (Br, Tr_full)) > 0.3).astype(jnp.float32)
    msk_r = msk_r.at[0, 0].set(1.0)
    out_r = jax.block_until_ready(language_model_criterion(inp_r, tgt_r, msk_r, xe_eps=0.05))
    ref_r = _reference(inp_r, tgt_r, msk_r, xe_eps=0.05)
    assert jnp.allclose(out_r, ref_r, rtol=1e-5, atol=1e-5), (out_r, ref_r)

    # --- test 4: ragged shapes, no smoothing, V % 128 != 0 -> streaming eps==0 branch ---
    out_r0 = jax.block_until_ready(language_model_criterion(inp_r, tgt_r, msk_r, xe_eps=0.0))
    ref_r0 = _reference(inp_r, tgt_r, msk_r, xe_eps=0.0)
    assert jnp.allclose(out_r0, ref_r0, rtol=1e-5, atol=1e-5), (out_r0, ref_r0)

    # --- test 5: bf16 log-probs streamed, float32 accumulation in-kernel ---
    inp_bf16 = inp.astype(jnp.bfloat16)
    out_b = jax.block_until_ready(language_model_criterion(inp_bf16, target, mask, xe_eps=0.1))
    ref_b = _reference(inp_bf16.astype(jnp.float32), target, mask, xe_eps=0.1)
    assert jnp.allclose(out_b, ref_b, rtol=1e-4, atol=1e-4), (out_b, ref_b)

    # --- test 6: gather path with a ragged number of rows (BT not a chunk multiple) ---
    Bg, Tg, Tg_full = 2, 5, 9
    inp_g = jax.nn.log_softmax(jax.random.normal(ks[6], (Bg, Tg, V), jnp.float32), axis=-1)
    tgt_g = jax.random.randint(ks[7], (Bg, Tg_full), 0, V, dtype=jnp.int32)
    msk_g = (jax.random.uniform(ks[8], (Bg, Tg_full)) > 0.3).astype(jnp.float32)
    msk_g = msk_g.at[0, 0].set(1.0)
    out_g = jax.block_until_ready(language_model_criterion(inp_g, tgt_g, msk_g, xe_eps=0.0))
    ref_g = _reference(inp_g, tgt_g, msk_g, xe_eps=0.0)
    assert jnp.allclose(out_g, ref_g, rtol=1e-5, atol=1e-5), (out_g, ref_g)

    print("KERNEL_OK")
</pallas_src>

<mosaic_0001>
module attributes {stable_mosaic.version = 11 : i64} {
  func.func @_lm_smooth_kernel(%arg0: i32, %arg1: i32, %arg2: memref<16x256xf32, #tpu.memory_space<vmem>>, %arg3: memref<16x1xi32, #tpu.memory_space<vmem>>, %arg4: memref<16x1xf32, #tpu.memory_space<vmem>>, %arg5: memref<1x8x128xf32, #tpu.memory_space<vmem>>, %arg6: memref<16x1xf32, #tpu.memory_space<vmem>>) attributes {dimension_semantics = [#tpu.dimension_semantics<parallel>, #tpu.dimension_semantics<arbitrary>], iteration_bounds = array<i64: 1, 1>, scalar_prefetch = 0 : i64, scratch_operands = 1 : i64, tpu.core_type = #tpu.core_type<tc>, window_params = [{transform_indices = @transform_0, window_bounds = array<i64: 16, 256>}, {transform_indices = @transform_1, window_bounds = array<i64: 16, 1>}, {transform_indices = @transform_2, window_bounds = array<i64: 16, 1>}, {transform_indices = @transform_3, window_bounds = array<i64: 1, 8, 128>}]} {
    %c0_i32 = arith.constant 0 : i32
    %0 = arith.cmpi eq, %arg1, %c0_i32 : i32
    %1 = arith.extui %0 : i1 to i32
    %c0_i32_0 = arith.constant 0 : i32
    %2 = arith.cmpi ne, %1, %c0_i32_0 : i32
    scf.if %2 {
      %cst_12 = arith.constant 0.000000e+00 : f32
      %23 = vector.broadcast %cst_12 : f32 to vector<16x1xf32>
      %c0_13 = arith.constant 0 : index
      %c0_14 = arith.constant 0 : index
      %24 = vector.load %arg6[%c0_13, %c0_14] : memref<16x1xf32, #tpu.memory_space<vmem>>, vector<16x1xf32>
      tpu.vector_store %arg6[%c0_13, %c0_14], %23 {strides = array<i32>} : memref<16x1xf32, #tpu.memory_space<vmem>>, vector<16x1xf32>,
    } else {
    }
    %c0 = arith.constant 0 : index
    %c0_1 = arith.constant 0 : index
    %3 = vector.load %arg2[%c0, %c0_1] : memref<16x256xf32, #tpu.memory_space<vmem>>, vector<16x256xf32>
    %c0_2 = arith.constant 0 : index
    %c0_3 = arith.constant 0 : index
    %4 = vector.load %arg3[%c0_2, %c0_3] : memref<16x1xi32, #tpu.memory_space<vmem>>, vector<16x1xi32>
    %5 = tpu.iota {dimensions = array<i32: 1>} : vector<16x256xi32>
    %c256_i32 = arith.constant 256 : i32
    %6 = arith.muli %arg1, %c256_i32 : i32
    %7 = vector.broadcast %6 : i32 to vector<16x1xi32>
    %8 = arith.subi %4, %7 : vector<16x1xi32>
    %9 = vector.broadcast %8 : vector<16x1xi32> to vector<16x256xi32>
    %10 = arith.cmpi eq, %5, %9 : vector<16x256xi32>
    %cst = arith.constant 0.899999976 : f32
    %cst_4 = arith.constant 3.92156857E-4 : f32
    %11 = vector.broadcast %cst : f32 to vector<16x256xf32>
    %12 = vector.broadcast %cst_4 : f32 to vector<16x256xf32>
    %13 = arith.select %10, %11, %12 : vector<16x256xi1>, vector<16x256xf32>
    %14 = arith.mulf %13, %3 : vector<16x256xf32>
    %c0_5 = arith.constant 0 : index
    %c0_6 = arith.constant 0 : index
    %15 = vector.load %arg6[%c0_5, %c0_6] : memref<16x1xf32, #tpu.memory_space<vmem>>, vector<16x1xf32>
    %cst_7 = arith.constant dense<0.000000e+00> : vector<16xf32>
    %16 = vector.multi_reduction <add>, %14, %cst_7 [1] : vector<16x256xf32> to vector<16xf32>
    %17 = vector.shape_cast %16 : vector<16xf32> to vector<16x1xf32>
    %18 = arith.addf %15, %17 : vector<16x1xf32>
    %c0_8 = arith.constant 0 : index
    %c0_9 = arith.constant 0 : index
    %19 = vector.load %arg6[%c0_8, %c0_9] : memref<16x1xf32, #tpu.memory_space<vmem>>, vector<16x1xf32>
    tpu.vector_store %arg6[%c0_8, %c0_9], %18 {strides = array<i32>} : memref<16x1xf32, #tpu.memory_space<vmem>>, vector<16x1xf32>,
    %c0_i32_10 = arith.constant 0 : i32
    %20 = arith.cmpi eq, %arg1, %c0_i32_10 : i32
    %21 = arith.extui %20 : i1 to i32
    %c0_i32_11 = arith.constant 0 : i32
    %22 = arith.cmpi ne, %21, %c0_i32_11 : i32
    scf.if %22 {
      %c0_12 = arith.constant 0 : index
      %c0_13 = arith.constant 0 : index
      %23 = vector.load %arg4[%c0_12, %c0_13] : memref<16x1xf32, #tpu.memory_space<vmem>>, vector<16x1xf32>
      %cst_14 = arith.constant 0.000000e+00 : f32
      %24 = vector.broadcast %cst_14 : f32 to vector<16x1xf32>
      %25 = arith.cmpf one, %23, %24 : vector<16x1xf32>
      %c0_15 = arith.constant 0 : index
      %c0_16 = arith.constant 0 : index
      %26 = vector.load %arg6[%c0_15, %c0_16] : memref<16x1xf32, #tpu.memory_space<vmem>>, vector<16x1xf32>
      %cst_17 = arith.constant 0.000000e+00 : f32
      %27 = vector.broadcast %cst_17 : f32 to vector<16x1xf32>
      %28 = arith.subf %27, %26 : vector<16x1xf32>
      %29 = arith.mulf %28, %23 : vector<16x1xf32>
      %cst_18 = arith.constant 0.000000e+00 : f32
      %30 = vector.broadcast %cst_18 : f32 to vector<16x1xf32>
      %31 = arith.select %25, %29, %30 : vector<16x1xi1>, vector<16x1xf32>
      %32 = vector.shape_cast %31 : vector<16x1xf32> to vector<1x16x1xf32>
      %cst_19 = arith.constant dense<0.000000e+00> : vector<1xf32>
      %33 = vector.multi_reduction <add>, %32, %cst_19 [1, 2] : vector<1x16x1xf32> to vector<1xf32>
      %34 = vector.shape_cast %33 : vector<1xf32> to vector<1x1x1xf32>
      %35 = vector.extract %34[0, 0, 0] : f32 from vector<1x1x1xf32>
      %36 = vector.broadcast %35 : f32 to vector<1x8x128xf32>
      %c0_20 = arith.constant 0 : index
      %c0_21 = arith.constant 0 : index
      %c0_22 = arith.constant 0 : index
      %37 = vector.load %arg5[%c0_20, %c0_21, %c0_22] : memref<1x8x128xf32, #tpu.memory_space<vmem>>, vector<1x8x128xf32>
      tpu.vector_store %arg5[%c0_20, %c0_21, %c0_22], %36 {strides = array<i32>} : memref<1x8x128xf32, #tpu.memory_space<vmem>>, vector<1x8x128xf32>,
    } else {
    }
    return
  }
  func.func @transform_0(%arg0: i32, %arg1: i32) -> (i32, i32) {
    %c0_i32 = arith.constant 0 : i32
    return %arg0, %arg1 : i32, i32
  }
  func.func @transform_1(%arg0: i32, %arg1: i32) -> (i32, i32) {
    %c0_i32 = arith.constant 0 : i32
    %c0_i32_0 = arith.constant 0 : i32
    return %arg0, %c0_i32 : i32, i32
  }
  func.func @transform_2(%arg0: i32, %arg1: i32) -> (i32, i32) {
    %c0_i32 = arith.constant 0 : i32
    %c0_i32_0 = arith.constant 0 : i32
    return %arg0, %c0_i32 : i32, i32
  }
  func.func @transform_3(%arg0: i32, %arg1: i32) -> (i32, i32, i32) {
    %c0_i32 = arith.constant 0 : i32
    %c0_i32_0 = arith.constant 0 : i32
    %c0_i32_1 = arith.constant 0 : i32
    return %arg0, %c0_i32, %c0_i32_0 : i32, i32, i32
  }
}

</mosaic_0001>

<llo_original>
// kernel: tpu_custom_call.1
$region0: #{tpu_custom_call.1}
  #allocation0 [shape = 'u32[]', space=smem, size = 0x4, offset = 0x4, fixed_abs, tag = 'smem constant byte address 0x4 - core index']
  #allocation1 [shape = 'u32[144,128]{1,0:T(1,128)}', space=vmem, size = 0x12000, scoped, tag = 'internal scratch']
  #allocation2 [shape = 'f32[16,1]{1,0:T(8,128)}', space=vmem, size = 0x2000, scoped, tag = 'scratch operand']
  %s0 = inlined_call_operand.vmem [shape: f32[16,256], index: 0, kind: input, shape index: {}]
  %s1 = inlined_call_operand.vmem [shape: s32[16,1], index: 1, kind: input, shape index: {}]
  %s2 = inlined_call_operand.vmem [shape: f32[16,1], index: 2, kind: input, shape index: {}]
  %s3 = inlined_call_operand.hbm [shape: f32[1,8,128], index: 3, kind: output, shape index: {}]
  %s4 = sld [smem:[#allocation0]]
  $region30: #{tpu_custom_call.1} parent=0
    _
  %s6 = ssub.s32 1, %s4
  %s7 = scalar_select 0, %s6, %s4
  $region1: #{tpu_custom_call.1} parent=0
    #allocation3 [shape = 'u8[4096]{0}', space=vmem, size = 0x1000, scoped, tag = 'output window, operand 0, single buffered']
    #allocation4 [shape = 's32[1]{0}', space=sflag, size = 0x4, scoped, tag = 'scoped memory for tpu_custom_call.1']
    %8 = vsyncpa [#allocation4], 0
    // Predicated region
    $region2: #{tpu_custom_call.1} parent=1 // pred_check
      _
    $region3: #{tpu_custom_call.1} parent=1 // pred_check_branch
      %10 = sbr.rel (0) target = $region5
    $region4: #{tpu_custom_call.1} parent=1 // pred_region
      _
    $region5: #{tpu_custom_call.1} parent=1 // pred_fallthru
      _
    // Predicated region
    $region6: #{tpu_custom_call.1} parent=1 // pred_check
      _
    $region7: #{tpu_custom_call.1} parent=1 // pred_check_branch
      %12 = sbr.rel (0) target = $region9
    $region8: #{tpu_custom_call.1} parent=1 // pred_region
      _
    $region9: #{tpu_custom_call.1} parent=1 // pred_fallthru
      _
    // Predicated region
    $region10: #{tpu_custom_call.1} parent=1 // pred_check
      _
    $region11: #{tpu_custom_call.1} parent=1 // pred_check_branch
      %14 = sbr.rel (0) target = $region13
    $region12: #{tpu_custom_call.1} parent=1 // pred_region
      _
    $region13: #{tpu_custom_call.1} parent=1 // pred_fallthru
      _
    %p15 = scmp.eq.s32.totalorder 0, 0
    // Predicated region
    $region14: #{tpu_custom_call.1} parent=1 // pred_check
      %p16 = pneg %p15
    $region15: #{tpu_custom_call.1} parent=1 // pred_check_branch
      %18 = sbr.rel (%p16) target = $region17
    $region16: #{tpu_custom_call.1} parent=1 // pred_region
      %vm19 = vcmask 7168
      %20 = vst.msk [vmem:[#allocation2] sm:$0xff] %vm19, 0.0
      %21 = vst.msk [vmem:[#allocation2 + $0x8] sm:$0xff] %vm19, 0.0
    $region17: #{tpu_custom_call.1} parent=1 // pred_fallthru
      _
    %v22 = vld [vmem:[%s0] sm:$0xff]
    %v23 = vld [vmem:[%s0 + $0x8] sm:$0xff]
    %v24 = vld [vmem:[%s0 + $0x10] sm:$0xff]
    %v25 = vld [vmem:[%s0 + $0x18] sm:$0xff]
    %v26 = vld [vmem:[%s1] sm:$0xff]
    %v27 = vld [vmem:[%s1 + $0x8] sm:$0xff]
    %v28 = vlaneseq
    %v29 = vand.u32 %v28, 127
    %v30 = vadd.s32 %v29, 128
    %s31 = smul.u32 0, 256
    %v32 = vstv %s31
    %v33 = vsub.s32 %v26, %v32
    %v34 = vsub.s32 %v27, %v32
    %35 = vset.pattern.permute.xlu0 0
    %36 = vperm.xlu0 %35, %v33
    %v37 = vpop.permute.xlu0 %36
    %38 = vset.pattern.permute.xlu0 0
    %39 = vperm.xlu0 %38, %v34
    %v40 = vpop.permute.xlu0 %39
    %vm41 = vcmp.eq.s32.totalorder %v29, %v37
    %vm42 = vcmp.eq.s32.totalorder %v30, %v37
    %vm43 = vcmp.eq.s32.totalorder %v29, %v40
    %vm44 = vcmp.eq.s32.totalorder %v30, %v40
    %v45 = vsel %vm41, 0.9, 0.00039215686
    %v46 = vsel %vm42, 0.9, 0.00039215686
    %v47 = vsel %vm43, 0.9, 0.00039215686
    %v48 = vsel %vm44, 0.9, 0.00039215686
    %v49 = vmul.f32 %v45, %v22
    %v50 = vmul.f32 %v46, %v23
    %v51 = vmul.f32 %v47, %v24
    %v52 = vmul.f32 %v48, %v25
    %v53 = vld [vmem:[#allocation2] sm:$0xff]
    %v54 = vld [vmem:[#allocation2 + $0x8] sm:$0xff]
    %v55 = vadd.f32 %v49, %v50
    %56 = vadd.xlane.f32.xlu0 %v55
    %v57 = vpop.xlane.xlu0 %56
    %v58 = vadd.f32 %v51, %v52
    %59 = vadd.xlane.f32.xlu0 %v58
    %v60 = vpop.xlane.xlu0 %59
    %v61 = vadd.f32 %v53, %v57
    %v62 = vadd.f32 %v54, %v60
    %vm63 = vcmask 7168
    %64 = vst.msk [vmem:[#allocation2] sm:$0xff] %vm63, %v61
    %65 = vst.msk [vmem:[#allocation2 + $0x8] sm:$0xff] %vm63, %v62
    // Predicated region
    $region18: #{tpu_custom_call.1} parent=1 // pred_check
      %p66 = pneg %p15
    $region19: #{tpu_custom_call.1} parent=1 // pred_check_branch
      %68 = sbr.rel (%p66) target = $region21
    $region20: #{tpu_custom_call.1} parent=1 // pred_region
      %v69 = vld [vmem:[%s2] sm:$0xff]
      %v70 = vld [vmem:[%s2 + $0x8] sm:$0xff]
      %vm71 = vcmp.ne.f32.partialorder %v69, 0.0
      %vm72 = vcmp.ne.f32.partialorder %v70, 0.0
      %v73 = vld [vmem:[#allocation2] sm:$0xff]
      %v74 = vld [vmem:[#allocation2 + $0x8] sm:$0xff]
      %v75 = vsub.f32 0.0, %v73
      %v76 = vsub.f32 0.0, %v74
      %v77 = vmul.f32 %v75, %v69
      %v78 = vmul.f32 %v76, %v70
      %v79 = vsel %vm71, %v77, 0.0
      %v80 = vsel %vm72, %v78, 0.0
      %v81 = vsel %vm63, %v79, 0.0
      %v82 = vsel %vm63, %v80, 0.0
      %v83 = vadd.f32 %v81, %v82
      %84 = vadd.xlane.f32.xlu0 %v83
      %v85 = vpop.xlane.xlu0 %84
      %v86 = vrot.slane %v85, 4
      %v87 = vadd.f32 %v85, %v86
      %v88 = vrot.slane %v87, 2
      %v89 = vadd.f32 %v87, %v88
      %v90 = vrot.slane %v89, 1
      %v91 = vadd.f32 %v89, %v90
      %s92 = vtos %v91
      %v93 = vstv %s92
      %94 = vst [vmem:[#allocation3] sm:$0xff] %v93
    $region21: #{tpu_custom_call.1} parent=1 // pred_fallthru
      _
    // Predicated region
    $region22: #{tpu_custom_call.1} parent=1 // pred_check
      _
    $region23: #{tpu_custom_call.1} parent=1 // pred_check_branch
      %96 = sbr.rel (0) target = $region25
    $region24: #{tpu_custom_call.1} parent=1 // pred_region
      %s98 = ssub.s32 128, 128
      %99 = vsyncadd [#allocation4], %s98
      %s101 = sshll.u32 [#allocation3], 4
      %s102 = int_to_ptr.vmem [resolvable:$true] %s101
      %104 = dma.vmem_to_hbm [thread:$0]  %s102, 128, %s3, [#allocation4]
    $region25: #{tpu_custom_call.1} parent=1 // pred_fallthru
      _
    // Predicated region
    $region26: #{tpu_custom_call.1} parent=1 // pred_check
      _
    $region27: #{tpu_custom_call.1} parent=1 // pred_check_branch
      %106 = sbr.rel (0) target = $region29
    $region28: #{tpu_custom_call.1} parent=1 // pred_region
      %107 = dma.done [#allocation4], 128
    $region29: #{tpu_custom_call.1} parent=1 // pred_fallthru
      _
    %108 = vsyncpa [#allocation4], 1

</llo_original>
